<compile_context>
chip_gen: v6e
topology: v6e:2x2x1
jax: 0.10.0
libtpu: 0.0.40
codegen_flags: <defaults>
</compile_context>

<pallas_src>
import functools
import math

import jax
import jax.numpy as jnp
from jax import lax
from jax.experimental import pallas as pl
from jax.experimental.pallas import tpu as pltpu

_LOG2E = 1.4426950408889634


def _vmem_limit_bytes():
    """Generation-aware scoped-VMEM budget (~65% of physical capacity)."""
    try:
        cap = int(pltpu.get_tpu_info().vmem_capacity_bytes)
    except Exception:
        cap = 64 * 1024 * 1024  # conservative fallback (v7x physical VMEM)
    return max(32 * 1024 * 1024, int(cap * 0.65))


# ---------------------------------------------------------------------------
# Pass 1: Q/K/V projection (done once; Q pre-scaled by log2(e)/sqrt(d_out)).
# ---------------------------------------------------------------------------
def _qkv_proj_kernel(x_ref, wq_ref, wk_ref, wv_ref, q_ref, k_ref, v_ref, *,
                     q_scale):
    x = x_ref[0]                                              # (ts, d_in)
    q = jnp.dot(x, wq_ref[...], preferred_element_type=jnp.float32)
    q_ref[0] = (q * q_scale).astype(q_ref.dtype)              # fold softmax scale
    k = jnp.dot(x, wk_ref[...], preferred_element_type=jnp.float32)
    k_ref[0] = k.astype(k_ref.dtype)
    v = jnp.dot(x, wv_ref[...], preferred_element_type=jnp.float32)
    v_ref[0] = v.astype(v_ref.dtype)


# ---------------------------------------------------------------------------
# Pass 2: flash attention over projected tiles (online softmax in base 2).
# ---------------------------------------------------------------------------
def _flash_attn_kernel(q_ref, k_ref, v_ref, o_ref, m_sc, l_sc, acc_sc):
    ki = pl.program_id(2)

    @pl.when(ki == 0)
    def _init():
        m_sc[...] = jnp.full_like(m_sc, -jnp.inf)
        l_sc[...] = jnp.zeros_like(l_sc)
        acc_sc[...] = jnp.zeros_like(acc_sc)

    q = q_ref[0]    # (tq, d_out), mxu dtype, already scaled by log2e/sqrt(d_out)
    k = k_ref[0]    # (tk, d_out), mxu dtype
    v = v_ref[0]    # (tk, d_out), mxu dtype

    # s = q @ k^T: contract last dims of both operands (no explicit k.T).
    s = lax.dot_general(q, k,
                        dimension_numbers=(((1,), (1,)), ((), ())),
                        preferred_element_type=jnp.float32)   # (tq, tk), log2 units

    # Online (flash) softmax in base 2. NOTE: causal mask intentionally inert,
    # matching the PyTorch reference (masked_fill result discarded).
    m_prev = m_sc[...]
    m_new = jnp.maximum(m_prev, jnp.max(s, axis=-1, keepdims=True))
    alpha = jnp.exp2(m_prev - m_new)                          # f32, EUP
    p = jnp.exp2(s - m_new)                                   # f32, EUP
    l_sc[...] = alpha * l_sc[...] + jnp.sum(p, axis=-1, keepdims=True)
    acc_sc[...] = alpha * acc_sc[...] + jnp.dot(
        p.astype(v.dtype), v, preferred_element_type=jnp.float32)
    m_sc[...] = m_new

    @pl.when(ki == pl.num_programs(2) - 1)
    def _finalize():
        inv_l = pl.reciprocal(l_sc[...], approx=False)        # exact, once/tile
        o_ref[0] = (acc_sc[...] * inv_l).astype(o_ref.dtype)


def self_attention(x, w_q, w_k, w_v, *, tq=128, tk=256, ts=256,
                   mxu_dtype=jnp.bfloat16):
    """x: (B, S, d_in); weights: (d_in, d_out). Returns (B, S, d_out)."""
    B, S, d_in = x.shape
    d_out = w_q.shape[1]
    tq = min(tq, S)
    tk = min(tk, S)
    ts = min(ts, S)
    assert S % tq == 0 and S % tk == 0 and S % ts == 0, (
        "seq_len must be divisible by tile sizes")

    vmem_limit = _vmem_limit_bytes()
    q_scale = _LOG2E / math.sqrt(d_out)

    # ---- Pass 1: project Q (pre-scaled), K, V once; store in mxu_dtype. ----
    proj_shape = jax.ShapeDtypeStruct((B, S, d_out), mxu_dtype)
    q, k, v = pl.pallas_call(
        functools.partial(_qkv_proj_kernel, q_scale=q_scale),
        out_shape=(proj_shape, proj_shape, proj_shape),
        grid_spec=pltpu.PrefetchScalarGridSpec(
            num_scalar_prefetch=0,
            grid=(B, S // ts),
            in_specs=[
                pl.BlockSpec((1, ts, d_in), lambda b, si: (b, si, 0)),
                pl.BlockSpec((d_in, d_out), lambda b, si: (0, 0)),
                pl.BlockSpec((d_in, d_out), lambda b, si: (0, 0)),
                pl.BlockSpec((d_in, d_out), lambda b, si: (0, 0)),
            ],
            out_specs=[
                pl.BlockSpec((1, ts, d_out), lambda b, si: (b, si, 0)),
                pl.BlockSpec((1, ts, d_out), lambda b, si: (b, si, 0)),
                pl.BlockSpec((1, ts, d_out), lambda b, si: (b, si, 0)),
            ],
        ),
        compiler_params=pltpu.CompilerParams(
            dimension_semantics=("parallel", "parallel"),
            vmem_limit_bytes=vmem_limit,
        ),
    )(x, w_q, w_k, w_v)

    # ---- Pass 2: flash attention; grid = (batch, q_tiles, kv_tiles). ----
    return pl.pallas_call(
        _flash_attn_kernel,
        out_shape=jax.ShapeDtypeStruct((B, S, d_out), x.dtype),
        grid_spec=pltpu.PrefetchScalarGridSpec(
            num_scalar_prefetch=0,
            grid=(B, S // tq, S // tk),
            in_specs=[
                pl.BlockSpec((1, tq, d_out), lambda b, qi, ki: (b, qi, 0)),
                pl.BlockSpec((1, tk, d_out), lambda b, qi, ki: (b, ki, 0)),
                pl.BlockSpec((1, tk, d_out), lambda b, qi, ki: (b, ki, 0)),
            ],
            out_specs=pl.BlockSpec((1, tq, d_out), lambda b, qi, ki: (b, qi, 0)),
            scratch_shapes=[
                pltpu.VMEM((tq, 1), jnp.float32),       # running max m
                pltpu.VMEM((tq, 1), jnp.float32),       # running sum l
                pltpu.VMEM((tq, d_out), jnp.float32),   # output accumulator
            ],
        ),
        compiler_params=pltpu.CompilerParams(
            dimension_semantics=("parallel", "parallel", "arbitrary"),
            vmem_limit_bytes=vmem_limit,
        ),
    )(q, k, v)


# ---------------------------------------------------------------------------
# References
# ---------------------------------------------------------------------------
def self_attention_ref(x, w_q, w_k, w_v):
    """Plain f32 reference (math of the PyTorch forward)."""
    q = x @ w_q
    k = x @ w_k
    v = x @ w_v
    s = jnp.einsum("bqd,bkd->bqk", q, k) / jnp.sqrt(jnp.float32(w_q.shape[1]))
    w = jax.nn.softmax(s, axis=-1)
    return jnp.einsum("bqk,bkd->bqd", w, v)


def self_attention_ref_quantized(x, w_q, w_k, w_v, mxu_dtype):
    """Reference with the same quantization points as the kernel's MXU path."""
    d_out = w_q.shape[1]
    scale = _LOG2E / math.sqrt(d_out)
    f32 = jnp.float32
    q = (jnp.dot(x, w_q) * scale).astype(mxu_dtype).astype(f32)
    k = jnp.dot(x, w_k).astype(mxu_dtype).astype(f32)
    v = jnp.dot(x, w_v).astype(mxu_dtype).astype(f32)
    s = jnp.einsum("bqd,bkd->bqk", q, k)
    m = jnp.max(s, axis=-1, keepdims=True)
    p = jnp.exp2(s - m)
    l = jnp.sum(p, axis=-1, keepdims=True)
    num = jnp.einsum("bqk,bkd->bqd", p.astype(mxu_dtype).astype(f32), v)
    return num / l


if __name__ == "__main__":
    # Module hyperparams (synthetic, deterministic init — no checkpoint loading)
    d_in, d_out = 16, 32
    context_length = 8   # mask buffer length; inert in the reference forward
    batch, seq_len = 2, 8

    key = jax.random.PRNGKey(0)
    kx, kq, kk, kv_ = jax.random.split(key, 4)

    x = jax.random.normal(kx, (batch, seq_len, d_in), dtype=jnp.float32)
    # torch.rand -> uniform [0, 1)
    w_q = jax.random.uniform(kq, (d_in, d_out), dtype=jnp.float32)
    w_k = jax.random.uniform(kk, (d_in, d_out), dtype=jnp.float32)
    w_v = jax.random.uniform(kv_, (d_in, d_out), dtype=jnp.float32)

    # Performance path: bf16 MXU operands, f32 accumulation (the default).
    out = jax.block_until_ready(self_attention(x, w_q, w_k, w_v))
    assert out.shape == (batch, seq_len, d_out)
    ref_q = self_attention_ref_quantized(x, w_q, w_k, w_v, jnp.bfloat16)
    assert jnp.allclose(out, ref_q, atol=3e-2, rtol=3e-2), \
        "bf16 path mismatch vs quant-matched reference"

    # Full-precision path: validates the flash / online-softmax structure tightly.
    out_f32 = jax.block_until_ready(
        self_attention(x, w_q, w_k, w_v, mxu_dtype=jnp.float32))
    ref = self_attention_ref(x, w_q, w_k, w_v)
    assert jnp.allclose(out_f32, ref, atol=1e-3, rtol=1e-3), \
        "f32 path mismatch vs reference"

    print("KERNEL_OK")
</pallas_src>

<mosaic_0001>
module attributes {stable_mosaic.version = 11 : i64} {
  func.func @_qkv_proj_kernel(%arg0: i32, %arg1: i32, %arg2: memref<1x8x16xf32, #tpu.memory_space<vmem>>, %arg3: memref<16x32xf32, #tpu.memory_space<vmem>>, %arg4: memref<16x32xf32, #tpu.memory_space<vmem>>, %arg5: memref<16x32xf32, #tpu.memory_space<vmem>>, %arg6: memref<1x8x32xbf16, #tpu.memory_space<vmem>>, %arg7: memref<1x8x32xbf16, #tpu.memory_space<vmem>>, %arg8: memref<1x8x32xbf16, #tpu.memory_space<vmem>>) attributes {dimension_semantics = [#tpu.dimension_semantics<parallel>, #tpu.dimension_semantics<parallel>], iteration_bounds = array<i64: 2, 1>, scalar_prefetch = 0 : i64, scratch_operands = 0 : i64, tpu.core_type = #tpu.core_type<tc>, window_params = [{transform_indices = @transform_0, window_bounds = array<i64: 1, 8, 16>}, {pipeline_mode = #tpu.pipeline_mode<synchronous>, transform_indices = @transform_1, window_bounds = array<i64: 16, 32>}, {pipeline_mode = #tpu.pipeline_mode<synchronous>, transform_indices = @transform_2, window_bounds = array<i64: 16, 32>}, {pipeline_mode = #tpu.pipeline_mode<synchronous>, transform_indices = @transform_3, window_bounds = array<i64: 16, 32>}, {transform_indices = @transform_4, window_bounds = array<i64: 1, 8, 32>}, {transform_indices = @transform_5, window_bounds = array<i64: 1, 8, 32>}, {transform_indices = @transform_6, window_bounds = array<i64: 1, 8, 32>}]} {
    %c0 = arith.constant 0 : index
    %c0_0 = arith.constant 0 : index
    %c0_1 = arith.constant 0 : index
    %0 = vector.load %arg2[%c0, %c0_0, %c0_1] : memref<1x8x16xf32, #tpu.memory_space<vmem>>, vector<1x8x16xf32>
    %1 = vector.shape_cast %0 : vector<1x8x16xf32> to vector<8x16xf32>
    %c0_2 = arith.constant 0 : index
    %c0_3 = arith.constant 0 : index
    %2 = vector.load %arg3[%c0_2, %c0_3] : memref<16x32xf32, #tpu.memory_space<vmem>>, vector<16x32xf32>
    %cst = arith.constant dense<0.000000e+00> : vector<8x32xf32>
    %3 = tpu.matmul %1, %2, %cst {dimension_numbers = #tpu.dot_dimension_numbers<[1], [0], [0], [1], [0, 0, 1, 1], [], []>} : vector<8x16xf32>, vector<16x32xf32>, vector<8x32xf32> -> vector<8x32xf32>
    %cst_4 = arith.constant 0.255034864 : f32
    %4 = vector.broadcast %cst_4 : f32 to vector<8x32xf32>
    %5 = arith.mulf %3, %4 : vector<8x32xf32>
    %6 = arith.truncf %5 : vector<8x32xf32> to vector<8x32xbf16>
    %c0_5 = arith.constant 0 : index
    %c0_6 = arith.constant 0 : index
    %c0_7 = arith.constant 0 : index
    %7 = vector.load %arg6[%c0_5, %c0_6, %c0_7] : memref<1x8x32xbf16, #tpu.memory_space<vmem>>, vector<1x8x32xbf16>
    %8 = vector.shape_cast %7 : vector<1x8x32xbf16> to vector<8x32xbf16>
    %9 = vector.shape_cast %6 : vector<8x32xbf16> to vector<1x8x32xbf16>
    tpu.vector_store %arg6[%c0_5, %c0_6, %c0_7], %9 {strides = array<i32>} : memref<1x8x32xbf16, #tpu.memory_space<vmem>>, vector<1x8x32xbf16>,
    %c0_8 = arith.constant 0 : index
    %c0_9 = arith.constant 0 : index
    %10 = vector.load %arg4[%c0_8, %c0_9] : memref<16x32xf32, #tpu.memory_space<vmem>>, vector<16x32xf32>
    %cst_10 = arith.constant dense<0.000000e+00> : vector<8x32xf32>
    %11 = tpu.matmul %1, %10, %cst_10 {dimension_numbers = #tpu.dot_dimension_numbers<[1], [0], [0], [1], [0, 0, 1, 1], [], []>} : vector<8x16xf32>, vector<16x32xf32>, vector<8x32xf32> -> vector<8x32xf32>
    %12 = arith.truncf %11 : vector<8x32xf32> to vector<8x32xbf16>
    %c0_11 = arith.constant 0 : index
    %c0_12 = arith.constant 0 : index
    %c0_13 = arith.constant 0 : index
    %13 = vector.load %arg7[%c0_11, %c0_12, %c0_13] : memref<1x8x32xbf16, #tpu.memory_space<vmem>>, vector<1x8x32xbf16>
    %14 = vector.shape_cast %13 : vector<1x8x32xbf16> to vector<8x32xbf16>
    %15 = vector.shape_cast %12 : vector<8x32xbf16> to vector<1x8x32xbf16>
    tpu.vector_store %arg7[%c0_11, %c0_12, %c0_13], %15 {strides = array<i32>} : memref<1x8x32xbf16, #tpu.memory_space<vmem>>, vector<1x8x32xbf16>,
    %c0_14 = arith.constant 0 : index
    %c0_15 = arith.constant 0 : index
    %16 = vector.load %arg5[%c0_14, %c0_15] : memref<16x32xf32, #tpu.memory_space<vmem>>, vector<16x32xf32>
    %cst_16 = arith.constant dense<0.000000e+00> : vector<8x32xf32>
    %17 = tpu.matmul %1, %16, %cst_16 {dimension_numbers = #tpu.dot_dimension_numbers<[1], [0], [0], [1], [0, 0, 1, 1], [], []>} : vector<8x16xf32>, vector<16x32xf32>, vector<8x32xf32> -> vector<8x32xf32>
    %18 = arith.truncf %17 : vector<8x32xf32> to vector<8x32xbf16>
    %c0_17 = arith.constant 0 : index
    %c0_18 = arith.constant 0 : index
    %c0_19 = arith.constant 0 : index
    %19 = vector.load %arg8[%c0_17, %c0_18, %c0_19] : memref<1x8x32xbf16, #tpu.memory_space<vmem>>, vector<1x8x32xbf16>
    %20 = vector.shape_cast %19 : vector<1x8x32xbf16> to vector<8x32xbf16>
    %21 = vector.shape_cast %18 : vector<8x32xbf16> to vector<1x8x32xbf16>
    tpu.vector_store %arg8[%c0_17, %c0_18, %c0_19], %21 {strides = array<i32>} : memref<1x8x32xbf16, #tpu.memory_space<vmem>>, vector<1x8x32xbf16>,
    return
  }
  func.func @transform_0(%arg0: i32, %arg1: i32) -> (i32, i32, i32) {
    %c0_i32 = arith.constant 0 : i32
    %c0_i32_0 = arith.constant 0 : i32
    return %arg0, %arg1, %c0_i32 : i32, i32, i32
  }
  func.func @transform_1(%arg0: i32, %arg1: i32) -> (i32, i32) {
    %c0_i32 = arith.constant 0 : i32
    %c0_i32_0 = arith.constant 0 : i32
    %c0_i32_1 = arith.constant 0 : i32
    return %c0_i32, %c0_i32_0 : i32, i32
  }
  func.func @transform_2(%arg0: i32, %arg1: i32) -> (i32, i32) {
    %c0_i32 = arith.constant 0 : i32
    %c0_i32_0 = arith.constant 0 : i32
    %c0_i32_1 = arith.constant 0 : i32
    return %c0_i32, %c0_i32_0 : i32, i32
  }
  func.func @transform_3(%arg0: i32, %arg1: i32) -> (i32, i32) {
    %c0_i32 = arith.constant 0 : i32
    %c0_i32_0 = arith.constant 0 : i32
    %c0_i32_1 = arith.constant 0 : i32
    return %c0_i32, %c0_i32_0 : i32, i32
  }
  func.func @transform_4(%arg0: i32, %arg1: i32) -> (i32, i32, i32) {
    %c0_i32 = arith.constant 0 : i32
    %c0_i32_0 = arith.constant 0 : i32
    return %arg0, %arg1, %c0_i32 : i32, i32, i32
  }
  func.func @transform_5(%arg0: i32, %arg1: i32) -> (i32, i32, i32) {
    %c0_i32 = arith.constant 0 : i32
    %c0_i32_0 = arith.constant 0 : i32
    return %arg0, %arg1, %c0_i32 : i32, i32, i32
  }
  func.func @transform_6(%arg0: i32, %arg1: i32) -> (i32, i32, i32) {
    %c0_i32 = arith.constant 0 : i32
    %c0_i32_0 = arith.constant 0 : i32
    return %arg0, %arg1, %c0_i32 : i32, i32, i32
  }
}

</mosaic_0001>

<llo_original>
// kernel: tpu_custom_call.1
$region0: #{tpu_custom_call.1}
  #allocation0 [shape = 'u32[]', space=smem, size = 0x4, offset = 0x4, fixed_abs, tag = 'smem constant byte address 0x4 - core index']
  #allocation1 [shape = 'u32[144,128]{1,0:T(1,128)}', space=vmem, size = 0x12000, scoped, tag = 'internal scratch']
  %s0 = inlined_call_operand.hbm [shape: f32[2,8,16], index: 0, kind: input, shape index: {}]
  %s1 = inlined_call_operand.hbm [shape: f32[16,32], index: 1, kind: input, shape index: {}]
  %s2 = inlined_call_operand.hbm [shape: f32[16,32], index: 2, kind: input, shape index: {}]
  %s3 = inlined_call_operand.hbm [shape: f32[16,32], index: 3, kind: input, shape index: {}]
  %s4 = inlined_call_operand.hbm [shape: bf16[2,8,32], index: 4, kind: output, shape index: {0}]
  %s5 = inlined_call_operand.hbm [shape: bf16[2,8,32], index: 5, kind: output, shape index: {1}]
  %s6 = inlined_call_operand.hbm [shape: bf16[2,8,32], index: 6, kind: output, shape index: {2}]
  %7 = xla_tuple %s4, %s5, %s6
  %s8 = sld [smem:[#allocation0]]
  $region81: #{tpu_custom_call.1} parent=0
    _
  %s10 = ssub.s32 1, %s8
  %s11 = scalar_select 0, %s10, %s8
  $region1: #{tpu_custom_call.1} parent=0
    #allocation2 [shape = 'u8[8192]{0}', space=vmem, size = 0x2000, scoped, tag = 'input window, operand 0']
    #allocation3 [shape = 's32[2]{0}', space=sflag, size = 0x8, scoped, tag = 'scoped memory for tpu_custom_call.1']
    #allocation4 [shape = 's32[2]{0}', space=sflag, size = 0x8, scoped, tag = 'scoped memory for tpu_custom_call.1']
    #allocation5 [shape = 'u8[8192]{0}', space=vmem, size = 0x2000, scoped, tag = 'input window, operand 1, single buffered']
    #allocation6 [shape = 's32[1]{0}', space=sflag, size = 0x4, scoped, tag = 'scoped memory for tpu_custom_call.1']
    #allocation7 [shape = 'u8[8192]{0}', space=vmem, size = 0x2000, scoped, tag = 'input window, operand 2, single buffered']
    #allocation8 [shape = 'u8[8192]{0}', space=vmem, size = 0x2000, scoped, tag = 'input window, operand 3, single buffered']
    #allocation9 [shape = 's32[1]{0}', space=sflag, size = 0x4, scoped, tag = 'scoped memory for tpu_custom_call.1']
    #allocation10 [shape = 'u8[4096]{0}', space=vmem, size = 0x1000, scoped, tag = 'output window, operand 0']
    #allocation11 [shape = 'u8[4096]{0}', space=vmem, size = 0x1000, scoped, tag = 'output window, operand 1']
    #allocation12 [shape = 's32[2]{0}', space=sflag, size = 0x8, scoped, tag = 'scoped memory for tpu_custom_call.1']
    #allocation13 [shape = 'u8[4096]{0}', space=vmem, size = 0x1000, scoped, tag = 'output window, operand 2']
    %12 = vsyncpa [#allocation3], 0
    %s13 = scalar_lea.sflag [#allocation3], 1
    %14 = vsyncpa %s13, 0
    %15 = vsyncpa [#allocation6], 0
    %16 = vsyncpa [#allocation9], 0
    %17 = vsyncpa [#allocation4], 0
    %s18 = scalar_lea.sflag [#allocation4], 1
    %19 = vsyncpa %s18, 0
    %20 = vsyncpa [#allocation12], 0
    %s21 = scalar_lea.sflag [#allocation12], 1
    %22 = vsyncpa %s21, 0
    loop: start=0, step=1, limit=4
    $region2: #{tpu_custom_call.1} parent=1 // loop_pre_header
      _
    $region3: #{tpu_custom_call.1} parent=1 // loop_header
      %s24 = sphi 0, %s28
      %p25 = scmp.ge.s32.totalorder %s24, 4
      %s31 = sphi 0, %s43
      %s32 = sphi 0, %s39
      %s33 = sphi 0, %s31
      %s34 = sphi 0, %s32
      %s35 = sphi 0, %s33
      %s36 = sphi 0, %s34
      %s48 = sphi 0, %s50
      %s51 = sphi 0, %s48
      %s52 = sphi 0, %s51
      %s68 = sphi 0, %s52
      %s72 = sphi 0, %s72
      %s74 = sphi 0, %s72
      %s75 = sphi 0, %s74
      %s89 = sphi 0, %s75
      %s93 = sphi 0, %s93
      %s95 = sphi 0, %s93
      %s96 = sphi 0, %s95
      %s110 = sphi 0, %s96
      %s114 = sphi 0, %s114
      %s116 = sphi 0, %s114
      %s117 = sphi 0, %s116
      %s131 = sphi 0, %s117
      %s139 = sphi 0, %s141
      %s142 = sphi 0, %s139
      %s143 = sphi 0, %s142
      %s159 = sphi 0, %s143
      %s167 = sphi 0, %s169
      %s170 = sphi 0, %s167
      %s171 = sphi 0, %s170
      %s187 = sphi 0, %s171
      %s195 = sphi 0, %s197
      %s198 = sphi 0, %s195
      %s199 = sphi 0, %s198
      %s215 = sphi 0, %s199
    $region4: #{tpu_custom_call.1} parent=1 // loop_header_branch
      %27 = sbr.rel (%p25) target = $region8
    $region5: #{tpu_custom_call.1} parent=1 // loop_body
      %s29 = ssub.s32 %s24, 1
      %s30 = ssub.s32 %s24, 2
      %s37 = sadd.s32 1, %s32
      %p38 = scmp.ge.s32.totalorder %s37, 1
      %s39 = scalar_select %p38, 0, %s37
      %s40 = sadd.s32 1, %s31
      %s41 = scalar_select %p38, %s40, %s31
      %p42 = scmp.ge.s32.totalorder %s41, 2
      %s43 = scalar_select %p42, 0, %s41
      %s44 = ssub.s32 %s31, %s43
      %s45 = ssub.s32 %s32, %s39
      %s46 = sor.u32 %s44, %s45
      %p47 = scmp.eq.s32.totalorder %s46, 0
      %s49 = sadd.s32 %s48, 1
      %s50 = scalar_select %p47, %s48, %s49
      %p53 = pneg %p47
      %p54 = scmp.eq.s32.totalorder %s24, 1
      %p55 = por %p53, %p54
      %p56 = scmp.ne.s32.totalorder %s48, %s51
      %p57 = scmp.eq.s32.totalorder %s24, 0
      %p58 = por %p56, %p57
      %p59 = scmp.ne.s32.totalorder %s48, %s51
      %p60 = scmp.eq.s32.totalorder %s29, 1
      %p61 = por %p59, %p60
      %p62 = scmp.ne.s32.totalorder %s51, %s52
      %p63 = scmp.eq.s32.totalorder %s29, 0
      %p64 = por %p62, %p63
      %p65 = scmp.ne.s32.totalorder %s51, %s52
      %p66 = scmp.eq.s32.totalorder %s30, 1
      %p67 = por %p65, %p66
      %p69 = scmp.ne.s32.totalorder %s52, %s68
      %p70 = scmp.eq.s32.totalorder %s30, 0
      %p71 = por %p69, %p70
      %s73 = sadd.s32 %s72, 1
      %p76 = scmp.eq.s32.totalorder %s24, 1
      %p77 = scmp.ne.s32.totalorder %s72, %s74
      %p78 = scmp.eq.s32.totalorder %s24, 0
      %p79 = por %p77, %p78
      %p80 = scmp.ne.s32.totalorder %s72, %s74
      %p81 = scmp.eq.s32.totalorder %s29, 1
      %p82 = por %p80, %p81
      %p83 = scmp.ne.s32.totalorder %s74, %s75
      %p84 = scmp.eq.s32.totalorder %s29, 0
      %p85 = por %p83, %p84
      %p86 = scmp.ne.s32.totalorder %s74, %s75
      %p87 = scmp.eq.s32.totalorder %s30, 1
      %p88 = por %p86, %p87
      %p90 = scmp.ne.s32.totalorder %s75, %s89
      %p91 = scmp.eq.s32.totalorder %s30, 0
      %p92 = por %p90, %p91
      %s94 = sadd.s32 %s93, 1
      %p97 = scmp.eq.s32.totalorder %s24, 1
      %p98 = scmp.ne.s32.totalorder %s93, %s95
      %p99 = scmp.eq.s32.totalorder %s24, 0
      %p100 = por %p98, %p99
      %p101 = scmp.ne.s32.totalorder %s93, %s95
      %p102 = scmp.eq.s32.totalorder %s29, 1
      %p103 = por %p101, %p102
      %p104 = scmp.ne.s32.totalorder %s95, %s96
      %p105 = scmp.eq.s32.totalorder %s29, 0
      %p106 = por %p104, %p105
      %p107 = scmp.ne.s32.totalorder %s95, %s96
      %p108 = scmp.eq.s32.totalorder %s30, 1
      %p109 = por %p107, %p108
      %p111 = scmp.ne.s32.totalorder %s96, %s110
      %p112 = scmp.eq.s32.totalorder %s30, 0
      %p113 = por %p111, %p112
      %s115 = sadd.s32 %s114, 1
      %p118 = scmp.eq.s32.totalorder %s24, 1
      %p119 = scmp.ne.s32.totalorder %s114, %s116
      %p120 = scmp.eq.s32.totalorder %s24, 0
      %p121 = por %p119, %p120
      %p122 = scmp.ne.s32.totalorder %s114, %s116
      %p123 = scmp.eq.s32.totalorder %s29, 1
      %p124 = por %p122, %p123
      %p125 = scmp.ne.s32.totalorder %s116, %s117
      %p126 = scmp.eq.s32.totalorder %s29, 0
      %p127 = por %p125, %p126
      %p128 = scmp.ne.s32.totalorder %s116, %s117
      %p129 = scmp.eq.s32.totalorder %s30, 1
      %p130 = por %p128, %p129
      %p132 = scmp.ne.s32.totalorder %s117, %s131
      %p133 = scmp.eq.s32.totalorder %s30, 0
      %p134 = por %p132, %p133
      %s135 = ssub.s32 %s31, %s43
      %s136 = ssub.s32 %s32, %s39
      %s137 = sor.u32 %s135, %s136
      %p138 = scmp.eq.s32.totalorder %s137, 0
      %s140 = sadd.s32 %s139, 1
      %s141 = scalar_select %p138, %s139, %s140
      %p144 = pneg %p138
      %p145 = scmp.eq.s32.totalorder %s24, 1
      %p146 = por %p144, %p145
      %p147 = scmp.ne.s32.totalorder %s139, %s142
      %p148 = scmp.eq.s32.totalorder %s24, 0
      %p149 = por %p147, %p148
      %p150 = scmp.ne.s32.totalorder %s139, %s142
      %p151 = scmp.eq.s32.totalorder %s29, 1
      %p152 = por %p150, %p151
      %p153 = scmp.ne.s32.totalorder %s142, %s143
      %p154 = scmp.eq.s32.totalorder %s29, 0
      %p155 = por %p153, %p154
      %p156 = scmp.ne.s32.totalorder %s142, %s143
      %p157 = scmp.eq.s32.totalorder %s30, 1
      %p158 = por %p156, %p157
      %p160 = scmp.ne.s32.totalorder %s143, %s159
      %p161 = scmp.eq.s32.totalorder %s30, 0
      %p162 = por %p160, %p161
      %s163 = ssub.s32 %s31, %s43
      %s164 = ssub.s32 %s32, %s39
      %s165 = sor.u32 %s163, %s164
      %p166 = scmp.eq.s32.totalorder %s165, 0
      %s168 = sadd.s32 %s167, 1
      %s169 = scalar_select %p166, %s167, %s168
      %p172 = pneg %p166
      %p173 = scmp.eq.s32.totalorder %s24, 1
      %p174 = por %p172, %p173
      %p175 = scmp.ne.s32.totalorder %s167, %s170
      %p176 = scmp.eq.s32.totalorder %s24, 0
      %p177 = por %p175, %p176
      %p178 = scmp.ne.s32.totalorder %s167, %s170
      %p179 = scmp.eq.s32.totalorder %s29, 1
      %p180 = por %p178, %p179
      %p181 = scmp.ne.s32.totalorder %s170, %s171
      %p182 = scmp.eq.s32.totalorder %s29, 0
      %p183 = por %p181, %p182
      %p184 = scmp.ne.s32.totalorder %s170, %s171
      %p185 = scmp.eq.s32.totalorder %s30, 1
      %p186 = por %p184, %p185
      %p188 = scmp.ne.s32.totalorder %s171, %s187
      %p189 = scmp.eq.s32.totalorder %s30, 0
      %p190 = por %p188, %p189
      %s191 = ssub.s32 %s31, %s43
      %s192 = ssub.s32 %s32, %s39
      %s193 = sor.u32 %s191, %s192
      %p194 = scmp.eq.s32.totalorder %s193, 0
      %s196 = sadd.s32 %s195, 1
      %s197 = scalar_select %p194, %s195, %s196
      %p200 = pneg %p194
      %p201 = scmp.eq.s32.totalorder %s24, 1
      %p202 = por %p200, %p201
      %p203 = scmp.ne.s32.totalorder %s195, %s198
      %p204 = scmp.eq.s32.totalorder %s24, 0
      %p205 = por %p203, %p204
      %p206 = scmp.ne.s32.totalorder %s195, %s198
      %p207 = scmp.eq.s32.totalorder %s29, 1
      %p208 = por %p206, %p207
      %p209 = scmp.ne.s32.totalorder %s198, %s199
      %p210 = scmp.eq.s32.totalorder %s29, 0
      %p211 = por %p209, %p210
      %p212 = scmp.ne.s32.totalorder %s198, %s199
      %p213 = scmp.eq.s32.totalorder %s30, 1
      %p214 = por %p212, %p213
      %p216 = scmp.ne.s32.totalorder %s199, %s215
      %p217 = scmp.eq.s32.totalorder %s30, 0
      %p218 = por %p216, %p217
      %p219 = scmp.le.s32.totalorder 1, %s24
      %p220 = scmp.lt.s32.totalorder %s24, 3
      %p221 = pnand %p219, %p220
      %p222 = pneg %p221
      // Predicated region
      $region9: #{tpu_custom_call.1} parent=5 // pred_check
        _
      $region10: #{tpu_custom_call.1} parent=5 // pred_check_branch
        %224 = sbr.rel (%p221) target = $region12
      $region11: #{tpu_custom_call.1} parent=5 // pred_region
        %s225 = ssub.s32 %s24, 1
        // Predicated region
        $region13: #{tpu_custom_call.1} parent=11 // pred_check
          %p226 = pneg %p85
        $region14: #{tpu_custom_call.1} parent=11 // pred_check_branch
          %228 = sbr.rel (%p226) target = $region16
        $region15: #{tpu_custom_call.1} parent=11 // pred_region
          %s230 = ssub.s32 256, 256
          %231 = vsyncadd [#allocation6], %s230
          %s232 = sshll.u32 [#allocation5], 4
          %s233 = int_to_ptr.vmem [resolvable:$true] %s232
          %238 = dma.hbm_to_vmem [thread:$0]  %s1, 256, %s233, [#allocation6], 128, 128, 8
        $region16: #{tpu_custom_call.1} parent=11 // pred_fallthru
          _
        // Predicated region
        $region17: #{tpu_custom_call.1} parent=11 // pred_check
          %p239 = pneg %p106
        $region18: #{tpu_custom_call.1} parent=11 // pred_check_branch
          %241 = sbr.rel (%p239) target = $region20
        $region19: #{tpu_custom_call.1} parent=11 // pred_region
          %s243 = ssub.s32 256, 256
          %244 = vsyncadd [#allocation6], %s243
          %s245 = sshll.u32 [#allocation7], 4
          %s246 = int_to_ptr.vmem [resolvable:$true] %s245
          %251 = dma.hbm_to_vmem [thread:$0]  %s2, 256, %s246, [#allocation6], 128, 128, 8
        $region20: #{tpu_custom_call.1} parent=11 // pred_fallthru
          _
        // Predicated region
        $region21: #{tpu_custom_call.1} parent=11 // pred_check
          %p252 = pneg %p127
        $region22: #{tpu_custom_call.1} parent=11 // pred_check_branch
          %254 = sbr.rel (%p252) target = $region24
        $region23: #{tpu_custom_call.1} parent=11 // pred_region
          %s256 = ssub.s32 256, 256
          %257 = vsyncadd [#allocation9], %s256
          %s258 = sshll.u32 [#allocation8], 4
          %s259 = int_to_ptr.vmem [resolvable:$true] %s258
          %264 = dma.hbm_to_vmem [thread:$0]  %s3, 256, %s259, [#allocation9], 128, 128, 8
        $region24: #{tpu_custom_call.1} parent=11 // pred_fallthru
          _
      $region12: #{tpu_custom_call.1} parent=5 // pred_fallthru
        _
      %p265 = scmp.lt.s32.totalorder %s24, 2
      // Predicated region
      $region25: #{tpu_custom_call.1} parent=5 // pred_check
        %p266 = pneg %p265
      $region26: #{tpu_custom_call.1} parent=5 // pred_check_branch
        %268 = sbr.rel (%p266) target = $region28
      $region27: #{tpu_custom_call.1} parent=5 // pred_region
        // Predicated region
        $region29: #{tpu_custom_call.1} parent=27 // pred_check
          %p269 = pneg %p58
        $region30: #{tpu_custom_call.1} parent=27 // pred_check_branch
          %271 = sbr.rel (%p269) target = $region32
        $region31: #{tpu_custom_call.1} parent=27 // pred_region
          %s272 = sand.u32 %s48, 1
          %s273 = scalar_lea.sflag [#allocation3], %s272
          %s274 = sand.u32 %s48, 1
          %s275 = smul.addr %s274, 8
          %s276 = scalar_lea.vmem [#allocation2], %s275
          %s278 = ssub.s32 128, 128
          %279 = vsyncadd %s273, %s278
          %s280 = sadd.s32 %s32, %s31
          %s281 = smul.addr %s280, 128
          %s282 = scalar_lea.hbm %s0, %s281
          %s284 = sshll.u32 %s276, 4
          %s285 = int_to_ptr.vmem [resolvable:$true] %s284
          %287 = dma.hbm_to_vmem [thread:$0]  %s282, 128, %s285, %s273
        $region32: #{tpu_custom_call.1} parent=27 // pred_fallthru
          _
      $region28: #{tpu_custom_call.1} parent=5 // pred_fallthru
        _
      %p288 = scmp.le.s32.totalorder 1, %s24
      %p289 = scmp.lt.s32.totalorder %s24, 3
      %p290 = pnand %p288, %p289
      %p291 = pneg %p290
      // Predicated region
      $region33: #{tpu_custom_call.1} parent=5 // pred_check
        _
      $region34: #{tpu_custom_call.1} parent=5 // pred_check_branch
        %293 = sbr.rel (%p290) target = $region36
      $region35: #{tpu_custom_call.1} parent=5 // pred_region
        %s294 = ssub.s32 %s24, 1
        %s295 = sand.u32 %s51, 1
        %s296 = scalar_lea.sflag [#allocation3], %s295
        %s297 = sand.u32 %s51, 1
        %s298 = smul.addr %s297, 8
        %s299 = scalar_lea.vmem [#allocation2], %s298
        // Predicated region
        $region37: #{tpu_custom_call.1} parent=35 // pred_check
          %p300 = pneg %p64
        $region38: #{tpu_custom_call.1} parent=35 // pred_check_branch
          %302 = sbr.rel (%p300) target = $region40
        $region39: #{tpu_custom_call.1} parent=35 // pred_region
          %303 = dma.done %s296, 128
        $region40: #{tpu_custom_call.1} parent=35 // pred_fallthru
          _
        // Predicated region
        $region41: #{tpu_custom_call.1} parent=35 // pred_check
          %p304 = pneg %p85
        $region42: #{tpu_custom_call.1} parent=35 // pred_check_branch
          %306 = sbr.rel (%p304) target = $region44
        $region43: #{tpu_custom_call.1} parent=35 // pred_region
          %307 = dma.done [#allocation6], 256
        $region44: #{tpu_custom_call.1} parent=35 // pred_fallthru
          _
        // Predicated region
        $region45: #{tpu_custom_call.1} parent=35 // pred_check
          %p308 = pneg %p106
        $region46: #{tpu_custom_call.1} parent=35 // pred_check_branch
          %310 = sbr.rel (%p308) target = $region48
        $region47: #{tpu_custom_call.1} parent=35 // pred_region
          %311 = dma.done [#allocation6], 256
        $region48: #{tpu_custom_call.1} parent=35 // pred_fallthru
          _
        // Predicated region
        $region49: #{tpu_custom_call.1} parent=35 // pred_check
          %p312 = pneg %p127
        $region50: #{tpu_custom_call.1} parent=35 // pred_check_branch
          %314 = sbr.rel (%p312) target = $region52
        $region51: #{tpu_custom_call.1} parent=35 // pred_region
          %315 = dma.done [#allocation9], 256
        $region52: #{tpu_custom_call.1} parent=35 // pred_fallthru
          _
        %s316 = sand.u32 %s51, 1
        %s317 = scalar_lea.sflag [#allocation3], %s316
        %s318 = sand.u32 %s51, 1
        %s319 = smul.addr %s318, 8
        %s320 = scalar_lea.vmem [#allocation2], %s319
        %p321 = pneg %p64
        %p322 = pneg %p61
        %p323 = pneg %p85
        %p324 = pneg %p82
        %p325 = pneg %p106
        %p326 = pneg %p103
        %p327 = pneg %p127
        %p328 = pneg %p124
        %p329 = pneg %p155
        %p330 = pneg %p152
        %s331 = sand.u32 %s142, 1
        %s332 = scalar_lea.sflag [#allocation4], %s331
        %s333 = sand.u32 %s142, 1
        %s334 = smul.addr %s333, 4
        %s335 = scalar_lea.vmem [#allocation10], %s334
        %p336 = pneg %p183
        %p337 = pneg %p180
        %s338 = sand.u32 %s29, 1
        %s339 = scalar_lea.sflag [#allocation12], %s338
        %s340 = sand.u32 %s170, 1
        %s341 = smul.addr %s340, 4
        %s342 = scalar_lea.vmem [#allocation11], %s341
        %p343 = pneg %p211
        %p344 = pneg %p208
        %s345 = sand.u32 %s29, 1
        %s346 = scalar_lea.sflag [#allocation12], %s345
        %s347 = sand.u32 %s198, 1
        %s348 = smul.addr %s347, 4
        %s349 = scalar_lea.vmem [#allocation13], %s348
        %v350 = vld [vmem:[%s299] sm:$0xff]
        %v351 = vld [vmem:[#allocation5] sm:$0xff]
        %v352 = vld [vmem:[#allocation5 + $0x8] sm:$0xff]
        %vm353 = vcmask 130048
        %v355 = vsel %vm353, %v350, 0
        %357 = vmatprep.subr.mxu0 0.0
        %358 = vmatpush1.msra.mxu0 0.0
        %359 = vmatprep.subr.mxu0 0.0
        %360 = vmatpush1.msra.mxu0 0.0
        %361 = vmatprep.subr.mxu0 0.0
        %362 = vmatpush1.msra.mxu0 0.0
        %363 = vmatprep.subr.mxu0 0.0
        %364 = vmatpush1.msra.mxu0 0.0
        %365 = vmatprep.subr.mxu0 0.0
        %366 = vmatpush1.msra.mxu0 0.0
        %367 = vmatprep.subr.mxu0 0.0
        %368 = vmatpush1.msra.mxu0 0.0
        %369 = vmatprep.subr.mxu0 0.0
        %370 = vmatpush1.msra.mxu0 0.0
        %371 = vmatprep.subr.mxu0 0.0
        %372 = vmatpush1.msra.mxu0 0.0
        %373 = vmatprep.subr.mxu0 0.0
        %374 = vmatpush1.msra.mxu0 0.0
        %375 = vmatprep.subr.mxu0 0.0
        %376 = vmatpush1.msra.mxu0 0.0
        %377 = vmatprep.subr.mxu0 0.0
        %378 = vmatpush1.msra.mxu0 0.0
        %379 = vmatprep.subr.mxu0 0.0
        %380 = vmatpush1.msra.mxu0 0.0
        %381 = vmatprep.subr.mxu0 0.0
        %382 = vmatpush1.msra.mxu0 0.0
        %383 = vmatprep.subr.mxu0 0.0
        %384 = vmatpush1.msra.mxu0 0.0
        %385 = vmatprep.subr.mxu0 0.0
        %386 = vmatpush1.msra.mxu0 %v352
        %387 = vmatprep.subr.mxu0 0.0
        %388 = vmatpush1.msra.mxu0 %v351
        %389 = vmatprep.subr.mxu0 0.0
        %390 = vmatpush2.msra.mxu0 0.0
        %391 = vmatprep.subr.mxu0 0.0
        %392 = vmatpush2.msra.mxu0 0.0
        %393 = vmatprep.subr.mxu0 0.0
        %394 = vmatpush2.msra.mxu0 0.0
        %395 = vmatprep.subr.mxu0 0.0
        %396 = vmatpush2.msra.mxu0 0.0
        %397 = vmatprep.subr.mxu0 0.0
        %398 = vmatpush2.msra.mxu0 0.0
        %399 = vmatprep.subr.mxu0 0.0
        %400 = vmatpush2.msra.mxu0 0.0
        %401 = vmatprep.subr.mxu0 0.0
        %402 = vmatpush2.msra.mxu0 0.0
        %403 = vmatprep.subr.mxu0 0.0
        %404 = vmatpush2.msra.mxu0 0.0
        %405 = vmatprep.subr.mxu0 0.0
        %406 = vmatpush2.msra.mxu0 0.0
        %407 = vmatprep.subr.mxu0 0.0
        %408 = vmatpush2.msra.mxu0 0.0
        %409 = vmatprep.subr.mxu0 0.0
        %410 = vmatpush2.msra.mxu0 0.0
        %411 = vmatprep.subr.mxu0 0.0
        %412 = vmatpush2.msra.mxu0 0.0
        %413 = vmatprep.subr.mxu0 0.0
        %414 = vmatpush2.msra.mxu0 0.0
        %415 = vmatprep.subr.mxu0 0.0
        %416 = vmatpush2.msra.mxu0 0.0
        %417 = vmatprep.subr.mxu0 0.0
        %418 = vmatpush2.msra.mxu0 0.0
        %419 = vmatprep.subr.mxu0 0.0
        %420 = vmatpush2.msra.mxu0 0.0
        %421 = vmatprep.mubr.f32.mxu0 0.0
        %422 = vmatmul.mubr.f32.gmra.mxu0 %v355
        %v423 = vpop.f32.mrf.mxu0
        %v424 = vadd.f32 0.0, %v423
        %v425 = vpop.f32.mrf.mxu0
        %426 = vdwg.mxu0
        %v427 = vmul.f32 %v424, 0.25503486
        %v428 = vpack.c.bf16 %v427, %v427
        %vm429 = vcmask 257024
        %430 = vst.msk [vmem:[%s335] sm:$0xf] %vm429, %v428
        %v431 = vld [vmem:[#allocation7] sm:$0xff]
        %v432 = vld [vmem:[#allocation7 + $0x8] sm:$0xff]
        %433 = vmatprep.subr.mxu0 0.0
        %434 = vmatpush1.msra.mxu0 0.0
        %435 = vmatprep.subr.mxu0 0.0
        %436 = vmatpush1.msra.mxu0 0.0
        %437 = vmatprep.subr.mxu0 0.0
        %438 = vmatpush1.msra.mxu0 0.0
        %439 = vmatprep.subr.mxu0 0.0
        %440 = vmatpush1.msra.mxu0 0.0
        %441 = vmatprep.subr.mxu0 0.0
        %442 = vmatpush1.msra.mxu0 0.0
        %443 = vmatprep.subr.mxu0 0.0
        %444 = vmatpush1.msra.mxu0 0.0
        %445 = vmatprep.subr.mxu0 0.0
        %446 = vmatpush1.msra.mxu0 0.0
        %447 = vmatprep.subr.mxu0 0.0
        %448 = vmatpush1.msra.mxu0 0.0
        %449 = vmatprep.subr.mxu0 0.0
        %450 = vmatpush1.msra.mxu0 0.0
        %451 = vmatprep.subr.mxu0 0.0
        %452 = vmatpush1.msra.mxu0 0.0
        %453 = vmatprep.subr.mxu0 0.0
        %454 = vmatpush1.msra.mxu0 0.0
        %455 = vmatprep.subr.mxu0 0.0
        %456 = vmatpush1.msra.mxu0 0.0
        %457 = vmatprep.subr.mxu0 0.0
        %458 = vmatpush1.msra.mxu0 0.0
        %459 = vmatprep.subr.mxu0 0.0
        %460 = vmatpush1.msra.mxu0 0.0
        %461 = vmatprep.subr.mxu0 0.0
        %462 = vmatpush1.msra.mxu0 %v432
        %463 = vmatprep.subr.mxu0 0.0
        %464 = vmatpush1.msra.mxu0 %v431
        %465 = vmatprep.subr.mxu0 0.0
        %466 = vmatpush2.msra.mxu0 0.0
        %467 = vmatprep.subr.mxu0 0.0
        %468 = vmatpush2.msra.mxu0 0.0
        %469 = vmatprep.subr.mxu0 0.0
        %470 = vmatpush2.msra.mxu0 0.0
        %471 = vmatprep.subr.mxu0 0.0
        %472 = vmatpush2.msra.mxu0 0.0
        %473 = vmatprep.subr.mxu0 0.0
        %474 = vmatpush2.msra.mxu0 0.0
        %475 = vmatprep.subr.mxu0 0.0
        %476 = vmatpush2.msra.mxu0 0.0
        %477 = vmatprep.subr.mxu0 0.0
        %478 = vmatpush2.msra.mxu0 0.0
        %479 = vmatprep.subr.mxu0 0.0
        %480 = vmatpush2.msra.mxu0 0.0
        %481 = vmatprep.subr.mxu0 0.0
        %482 = vmatpush2.msra.mxu0 0.0
        %483 = vmatprep.subr.mxu0 0.0
        %484 = vmatpush2.msra.mxu0 0.0
        %485 = vmatprep.subr.mxu0 0.0
        %486 = vmatpush2.msra.mxu0 0.0
        %487 = vmatprep.subr.mxu0 0.0
        %488 = vmatpush2.msra.mxu0 0.0
        %489 = vmatprep.subr.mxu0 0.0
        %490 = vmatpush2.msra.mxu0 0.0
        %491 = vmatprep.subr.mxu0 0.0
        %492 = vmatpush2.msra.mxu0 0.0
        %493 = vmatprep.subr.mxu0 0.0
        %494 = vmatpush2.msra.mxu0 0.0
        %495 = vmatprep.subr.mxu0 0.0
        %496 = vmatpush2.msra.mxu0 0.0
        %497 = vmatprep.mubr.f32.mxu0 0.0
        %498 = vmatmul.mubr.f32.gmra.mxu0 %v355
        %v499 = vpop.f32.mrf.mxu0
        %v500 = vadd.f32 0.0, %v499
        %v501 = vpop.f32.mrf.mxu0
        %502 = vdwg.mxu0
        %v503 = vpack.c.bf16 %v500, %v500
        %504 = vst.msk [vmem:[%s342] sm:$0xf] %vm429, %v503
        %v505 = vld [vmem:[#allocation8] sm:$0xff]
        %v506 = vld [vmem:[#allocation8 + $0x8] sm:$0xff]
        %507 = vmatprep.subr.mxu0 0.0
        %508 = vmatpush1.msra.mxu0 0.0
        %509 = vmatprep.subr.mxu0 0.0
        %510 = vmatpush1.msra.mxu0 0.0
        %511 = vmatprep.subr.mxu0 0.0
        %512 = vmatpush1.msra.mxu0 0.0
        %513 = vmatprep.subr.mxu0 0.0
        %514 = vmatpush1.msra.mxu0 0.0
        %515 = vmatprep.subr.mxu0 0.0
        %516 = vmatpush1.msra.mxu0 0.0
        %517 = vmatprep.subr.mxu0 0.0
        %518 = vmatpush1.msra.mxu0 0.0
        %519 = vmatprep.subr.mxu0 0.0
        %520 = vmatpush1.msra.mxu0 0.0
        %521 = vmatprep.subr.mxu0 0.0
        %522 = vmatpush1.msra.mxu0 0.0
        %523 = vmatprep.subr.mxu0 0.0
        %524 = vmatpush1.msra.mxu0 0.0
        %525 = vmatprep.subr.mxu0 0.0
        %526 = vmatpush1.msra.mxu0 0.0
        %527 = vmatprep.subr.mxu0 0.0
        %528 = vmatpush1.msra.mxu0 0.0
        %529 = vmatprep.subr.mxu0 0.0
        %530 = vmatpush1.msra.mxu0 0.0
        %531 = vmatprep.subr.mxu0 0.0
        %532 = vmatpush1.msra.mxu0 0.0
        %533 = vmatprep.subr.mxu0 0.0
        %534 = vmatpush1.msra.mxu0 0.0
        %535 = vmatprep.subr.mxu0 0.0
        %536 = vmatpush1.msra.mxu0 %v506
        %537 = vmatprep.subr.mxu0 0.0
        %538 = vmatpush1.msra.mxu0 %v505
        %539 = vmatprep.subr.mxu0 0.0
        %540 = vmatpush2.msra.mxu0 0.0
        %541 = vmatprep.subr.mxu0 0.0
        %542 = vmatpush2.msra.mxu0 0.0
        %543 = vmatprep.subr.mxu0 0.0
        %544 = vmatpush2.msra.mxu0 0.0
        %545 = vmatprep.subr.mxu0 0.0
        %546 = vmatpush2.msra.mxu0 0.0
        %547 = vmatprep.subr.mxu0 0.0
        %548 = vmatpush2.msra.mxu0 0.0
        %549 = vmatprep.subr.mxu0 0.0
        %550 = vmatpush2.msra.mxu0 0.0
        %551 = vmatprep.subr.mxu0 0.0
        %552 = vmatpush2.msra.mxu0 0.0
        %553 = vmatprep.subr.mxu0 0.0
        %554 = vmatpush2.msra.mxu0 0.0
        %555 = vmatprep.subr.mxu0 0.0
        %556 = vmatpush2.msra.mxu0 0.0
        %557 = vmatprep.subr.mxu0 0.0
        %558 = vmatpush2.msra.mxu0 0.0
        %559 = vmatprep.subr.mxu0 0.0
        %560 = vmatpush2.msra.mxu0 0.0
        %561 = vmatprep.subr.mxu0 0.0
        %562 = vmatpush2.msra.mxu0 0.0
        %563 = vmatprep.subr.mxu0 0.0
        %564 = vmatpush2.msra.mxu0 0.0
        %565 = vmatprep.subr.mxu0 0.0
        %566 = vmatpush2.msra.mxu0 0.0
        %567 = vmatprep.subr.mxu0 0.0
        %568 = vmatpush2.msra.mxu0 0.0
        %569 = vmatprep.subr.mxu0 0.0
        %570 = vmatpush2.msra.mxu0 0.0
        %571 = vmatprep.mubr.f32.mxu0 0.0
        %572 = vmatmul.mubr.f32.gmra.mxu0 %v355
        %v573 = vpop.f32.mrf.mxu0
        %v574 = vadd.f32 0.0, %v573
        %v575 = vpop.f32.mrf.mxu0
        %576 = vdwg.mxu0
        %v577 = vpack.c.bf16 %v574, %v574
        %578 = vst.msk [vmem:[%s349] sm:$0xf] %vm429, %v577
        %s579 = sand.u32 %s142, 1
        %s580 = scalar_lea.sflag [#allocation4], %s579
        %s581 = sand.u32 %s142, 1
        %s582 = smul.addr %s581, 4
        %s583 = scalar_lea.vmem [#allocation10], %s582
        %s584 = sand.u32 %s29, 1
        %s585 = scalar_lea.sflag [#allocation12], %s584
        %s586 = sand.u32 %s170, 1
        %s587 = smul.addr %s586, 4
        %s588 = scalar_lea.vmem [#allocation11], %s587
        %s589 = sand.u32 %s29, 1
        %s590 = scalar_lea.sflag [#allocation12], %s589
        %s591 = sand.u32 %s198, 1
        %s592 = smul.addr %s591, 4
        %s593 = scalar_lea.vmem [#allocation13], %s592
        // Predicated region
        $region53: #{tpu_custom_call.1} parent=35 // pred_check
          %p594 = pneg %p152
        $region54: #{tpu_custom_call.1} parent=35 // pred_check_branch
          %596 = sbr.rel (%p594) target = $region56
        $region55: #{tpu_custom_call.1} parent=35 // pred_region
          %s598 = ssub.s32 64, 64
          %599 = vsyncadd %s580, %s598
          %s600 = sadd.s32 %s34, %s33
          %s601 = smul.addr %s600, 64
          %s602 = scalar_lea.hbm %s4, %s601
          %s604 = sshll.u32 %s583, 4
          %s605 = int_to_ptr.vmem [resolvable:$true] %s604
          %607 = dma.vmem_to_hbm [thread:$0]  %s605, 64, %s602, %s580
        $region56: #{tpu_custom_call.1} parent=35 // pred_fallthru
          _
        // Predicated region
        $region57: #{tpu_custom_call.1} parent=35 // pred_check
          %p608 = pneg %p180
        $region58: #{tpu_custom_call.1} parent=35 // pred_check_branch
          %610 = sbr.rel (%p608) target = $region60
        $region59: #{tpu_custom_call.1} parent=35 // pred_region
          %s612 = ssub.s32 64, 64
          %613 = vsyncadd %s585, %s612
          %s614 = sadd.s32 %s34, %s33
          %s615 = smul.addr %s614, 64
          %s616 = scalar_lea.hbm %s5, %s615
          %s618 = sshll.u32 %s588, 4
          %s619 = int_to_ptr.vmem [resolvable:$true] %s618
          %621 = dma.vmem_to_hbm [thread:$0]  %s619, 64, %s616, %s585
        $region60: #{tpu_custom_call.1} parent=35 // pred_fallthru
          _
        // Predicated region
        $region61: #{tpu_custom_call.1} parent=35 // pred_check
          %p622 = pneg %p208
        $region62: #{tpu_custom_call.1} parent=35 // pred_check_branch
          %624 = sbr.rel (%p622) target = $region64
        $region63: #{tpu_custom_call.1} parent=35 // pred_region
          %s626 = ssub.s32 64, 64
          %627 = vsyncadd %s590, %s626
          %s628 = sadd.s32 %s34, %s33
          %s629 = smul.addr %s628, 64
          %s630 = scalar_lea.hbm %s6, %s629
          %s632 = sshll.u32 %s593, 4
          %s633 = int_to_ptr.vmem [resolvable:$true] %s632
          %635 = dma.vmem_to_hbm [thread:$0]  %s633, 64, %s630, %s590
        $region64: #{tpu_custom_call.1} parent=35 // pred_fallthru
          _
      $region36: #{tpu_custom_call.1} parent=5 // pred_fallthru
        _
      %p636 = scmp.le.s32.totalorder 2, %s24
      // Predicated region
      $region65: #{tpu_custom_call.1} parent=5 // pred_check
        %p637 = pneg %p636
      $region66: #{tpu_custom_call.1} parent=5 // pred_check_branch
        %639 = sbr.rel (%p637) target = $region68
      $region67: #{tpu_custom_call.1} parent=5 // pred_region
        %s640 = ssub.s32 %s24, 2
        // Predicated region
        $region69: #{tpu_custom_call.1} parent=67 // pred_check
          %p641 = pneg %p158
        $region70: #{tpu_custom_call.1} parent=67 // pred_check_branch
          %643 = sbr.rel (%p641) target = $region72
        $region71: #{tpu_custom_call.1} parent=67 // pred_region
          %s644 = sand.u32 %s143, 1
          %s645 = scalar_lea.sflag [#allocation4], %s644
          %s646 = sand.u32 %s143, 1
          %s647 = smul.addr %s646, 4
          %s648 = scalar_lea.vmem [#allocation10], %s647
          %649 = dma.done %s645, 64
        $region72: #{tpu_custom_call.1} parent=67 // pred_fallthru
          _
        // Predicated region
        $region73: #{tpu_custom_call.1} parent=67 // pred_check
          %p650 = pneg %p186
        $region74: #{tpu_custom_call.1} parent=67 // pred_check_branch
          %652 = sbr.rel (%p650) target = $region76
        $region75: #{tpu_custom_call.1} parent=67 // pred_region
          %s653 = sand.u32 %s30, 1
          %s654 = scalar_lea.sflag [#allocation12], %s653
          %s655 = sand.u32 %s171, 1
          %s656 = smul.addr %s655, 4
          %s657 = scalar_lea.vmem [#allocation11], %s656
          %658 = dma.done %s654, 64
        $region76: #{tpu_custom_call.1} parent=67 // pred_fallthru
          _
        // Predicated region
        $region77: #{tpu_custom_call.1} parent=67 // pred_check
          %p659 = pneg %p214
        $region78: #{tpu_custom_call.1} parent=67 // pred_check_branch
          %661 = sbr.rel (%p659) target = $region80
        $region79: #{tpu_custom_call.1} parent=67 // pred_region
          %s662 = sand.u32 %s30, 1
          %s663 = scalar_lea.sflag [#allocation12], %s662
          %s664 = sand.u32 %s199, 1
          %s665 = smul.addr %s664, 4
          %s666 = scalar_lea.vmem [#allocation13], %s665
          %667 = dma.done %s663, 64
        $region80: #{tpu_custom_call.1} parent=67 // pred_fallthru
          _
      $region68: #{tpu_custom_call.1} parent=5 // pred_fallthru
        _
    $region6: #{tpu_custom_call.1} parent=1 // loop_footer
      %s28 = sadd.s32 1, %s24
    $region7: #{tpu_custom_call.1} parent=1 // loop_footer_branch
      %23 = sbr.rel target = $region3
    $region8: #{tpu_custom_call.1} parent=1 // loop_exit
      _
    %668 = vsyncpa [#allocation3], 1
    %s669 = scalar_lea.sflag [#allocation3], 1
    %670 = vsyncpa %s669, 1
    %671 = vsyncpa [#allocation6], 1
    %672 = vsyncpa [#allocation9], 1
    %673 = vsyncpa [#allocation4], 1
    %s674 = scalar_lea.sflag [#allocation4], 1
    %675 = vsyncpa %s674, 1
    %676 = vsyncpa [#allocation12], 1
    %s677 = scalar_lea.sflag [#allocation12], 1
    %678 = vsyncpa %s677, 1

</llo_original>
